<compile_context>
chip_gen: v7x
topology: tpu7x:2x2x1
jax: 0.10.0
libtpu: 0.0.40
codegen_flags: <defaults>
</compile_context>

<pallas_src>
import jax
import jax.numpy as jnp
from jax.experimental import pallas as pl
from jax.experimental.pallas import tpu as pltpu


def _round_up(x, m):
    return (x + m - 1) // m * m


def _patch_embed_kernel(p_ref, w_ref, b_ref, o_ref):
    # p_ref: (K, TM)      im2col patch columns for this (batch, tile) grid step
    # w_ref: (Epad, K)    projection weight, VMEM-resident across the grid
    # b_ref: (Epad, 1)    bias, VMEM-resident
    # o_ref: (Epad, TM)   output tile in channel-major (NCHW-compatible) layout
    acc = jnp.dot(w_ref[...], p_ref[...], preferred_element_type=jnp.float32)
    o_ref[...] = (acc + b_ref[...]).astype(o_ref.dtype)


def patch_embed_forward(x, weight, bias, patch_size, *, tm=512,
                        compute_dtype=None):
    """x: (B, C, H, W) NCHW.  weight: (E, C, ph, pw) (PyTorch Conv2d layout).
    bias: (E,).  Returns (B, E, H//ph, W//pw) NCHW, matching nn.Conv2d with
    kernel=stride=patch_size, padding=0.

    tm: patches (output spatial positions) per grid step; multiple of 128.
    compute_dtype: optionally cast MXU operands (e.g. jnp.bfloat16 on v6e/v7x);
                   accumulation is always f32.
    """
    B, C, H, W = x.shape
    ph, pw = patch_size
    assert H % ph == 0 and W % pw == 0, (
        "PatchEmbed (padding=0) requires H, W divisible by patch_size")
    E = weight.shape[0]
    Hp, Wp = H // ph, W // pw
    Msp = Hp * Wp                 # spatial patches per batch element
    K = C * ph * pw
    Epad = _round_up(E, 8)        # sublane-aligned output channel dim

    # --- glue: im2col in (B, K, Msp) layout; K ordering (c, kh, kw) matches
    #     the PyTorch conv-weight reshape.  reshape is metadata-only; one XLA
    #     transpose of the (small) input follows.
    patches = x.reshape(B, C, Hp, ph, Wp, pw).transpose(0, 1, 3, 5, 2, 4)
    patches = patches.reshape(B, K, Msp)
    # Conv weight (E, C, ph, pw) -> (E, K): native layout, no transpose.
    w2 = weight.reshape(E, K)
    b2 = bias.reshape(E, 1)
    if Epad != E:
        w2 = jnp.pad(w2, ((0, Epad - E), (0, 0)))
        b2 = jnp.pad(b2, ((0, Epad - E), (0, 0)))

    if compute_dtype is not None:
        patches = patches.astype(compute_dtype)
        w2 = w2.astype(compute_dtype)

    # Tile over the spatial-patch axis (lane axis of the output).
    if Msp <= tm:
        TM = Msp                  # full extent: exempt from the 128 rule
    else:
        assert tm % 128 == 0, "tm must be a multiple of 128"
        TM = tm
    grid = (B, pl.cdiv(Msp, TM))

    out_dtype = x.dtype
    cost = pl.CostEstimate(
        flops=2 * B * Msp * K * Epad,
        transcendentals=0,
        bytes_accessed=(patches.size * patches.dtype.itemsize
                        + w2.size * w2.dtype.itemsize
                        + b2.size * b2.dtype.itemsize
                        + B * Epad * Msp * jnp.dtype(out_dtype).itemsize))

    out = pl.pallas_call(
        _patch_embed_kernel,
        out_shape=jax.ShapeDtypeStruct((B, Epad, Msp), out_dtype),
        grid_spec=pltpu.PrefetchScalarGridSpec(
            num_scalar_prefetch=0,
            grid=grid,
            in_specs=[
                pl.BlockSpec((None, K, TM), lambda b, m: (b, 0, m)),  # patches
                pl.BlockSpec((Epad, K), lambda b, m: (0, 0)),         # weight
                pl.BlockSpec((Epad, 1), lambda b, m: (0, 0)),         # bias
            ],
            out_specs=pl.BlockSpec((None, Epad, TM), lambda b, m: (b, 0, m)),
        ),
        compiler_params=pltpu.CompilerParams(
            dimension_semantics=("parallel", "parallel")),
        cost_estimate=cost,
    )(patches, w2, b2)

    if Epad != E:
        out = out[:, :E, :]

    # Metadata-only reshape to the PyTorch Conv2d NCHW output.
    return out.reshape(B, E, Hp, Wp)


if __name__ == "__main__":
    # Small shapes consistent with the module: img_size=16, patch_size=4,
    # in_chans=4, embed_dim=32, batch=2.
    B, C, H, W = 2, 4, 16, 16
    patch_size = (4, 4)
    embed_dim = 32

    key = jax.random.PRNGKey(0)
    kx, kw, kb = jax.random.split(key, 3)
    x = jax.random.normal(kx, (B, C, H, W), dtype=jnp.float32)
    # Deterministic synthetic parameters (PyTorch Conv2d weight layout E,C,kh,kw).
    weight = 0.02 * jax.random.normal(
        kw, (embed_dim, C, patch_size[0], patch_size[1]), dtype=jnp.float32)
    bias = 0.01 * jax.random.normal(kb, (embed_dim,), dtype=jnp.float32)

    out = patch_embed_forward(x, weight, bias, patch_size)
    out = jax.block_until_ready(out)

    # Reference check (pure JAX strided conv via einsum over patches).
    Hp, Wp = H // patch_size[0], W // patch_size[1]
    patches = x.reshape(B, C, Hp, patch_size[0], Wp, patch_size[1]) \
               .transpose(0, 2, 4, 1, 3, 5) \
               .reshape(B, Hp, Wp, C * patch_size[0] * patch_size[1])
    ref = jnp.einsum("bhwk,ek->behw",
                     patches,
                     weight.reshape(embed_dim, -1)) + bias[None, :, None, None]
    assert out.shape == (B, embed_dim, Hp, Wp)
    assert jnp.allclose(out, ref, atol=1e-4, rtol=1e-4)

    print("KERNEL_OK")
</pallas_src>

<mosaic_0001>
module attributes {stable_mosaic.version = 11 : i64} {
  func.func @_patch_embed_kernel(%arg0: i32, %arg1: i32, %arg2: memref<1x64x16xf32, #tpu.memory_space<vmem>>, %arg3: memref<32x64xf32, #tpu.memory_space<vmem>>, %arg4: memref<32x1xf32, #tpu.memory_space<vmem>>, %arg5: memref<1x32x16xf32, #tpu.memory_space<vmem>>) attributes {dimension_semantics = [#tpu.dimension_semantics<parallel>, #tpu.dimension_semantics<parallel>], iteration_bounds = array<i64: 2, 1>, scalar_prefetch = 0 : i64, scratch_operands = 0 : i64, tpu.core_type = #tpu.core_type<tc>, window_params = [{transform_indices = @transform_0, window_bounds = array<i64: 1, 64, 16>}, {pipeline_mode = #tpu.pipeline_mode<synchronous>, transform_indices = @transform_1, window_bounds = array<i64: 32, 64>}, {pipeline_mode = #tpu.pipeline_mode<synchronous>, transform_indices = @transform_2, window_bounds = array<i64: 32, 1>}, {transform_indices = @transform_3, window_bounds = array<i64: 1, 32, 16>}]} {
    %c0 = arith.constant 0 : index
    %c0_0 = arith.constant 0 : index
    %0 = vector.load %arg3[%c0, %c0_0] : memref<32x64xf32, #tpu.memory_space<vmem>>, vector<32x64xf32>
    %c0_1 = arith.constant 0 : index
    %c0_2 = arith.constant 0 : index
    %c0_3 = arith.constant 0 : index
    %1 = vector.load %arg2[%c0_1, %c0_2, %c0_3] : memref<1x64x16xf32, #tpu.memory_space<vmem>>, vector<1x64x16xf32>
    %2 = vector.shape_cast %1 : vector<1x64x16xf32> to vector<64x16xf32>
    %cst = arith.constant dense<0.000000e+00> : vector<32x16xf32>
    %3 = tpu.matmul %0, %2, %cst {dimension_numbers = #tpu.dot_dimension_numbers<[1], [0], [0], [1], [0, 0, 1, 1], [], []>} : vector<32x64xf32>, vector<64x16xf32>, vector<32x16xf32> -> vector<32x16xf32>
    %c0_4 = arith.constant 0 : index
    %c0_5 = arith.constant 0 : index
    %4 = vector.load %arg4[%c0_4, %c0_5] : memref<32x1xf32, #tpu.memory_space<vmem>>, vector<32x1xf32>
    %5 = vector.broadcast %4 : vector<32x1xf32> to vector<32x16xf32>
    %6 = arith.addf %3, %5 : vector<32x16xf32>
    %c0_6 = arith.constant 0 : index
    %c0_7 = arith.constant 0 : index
    %c0_8 = arith.constant 0 : index
    %7 = vector.load %arg5[%c0_6, %c0_7, %c0_8] : memref<1x32x16xf32, #tpu.memory_space<vmem>>, vector<1x32x16xf32>
    %8 = vector.shape_cast %7 : vector<1x32x16xf32> to vector<32x16xf32>
    %9 = vector.shape_cast %6 : vector<32x16xf32> to vector<1x32x16xf32>
    tpu.vector_store %arg5[%c0_6, %c0_7, %c0_8], %9 {strides = array<i32>} : memref<1x32x16xf32, #tpu.memory_space<vmem>>, vector<1x32x16xf32>,
    return
  }
  func.func @transform_0(%arg0: i32, %arg1: i32) -> (i32, i32, i32) {
    %c0_i32 = arith.constant 0 : i32
    %c0_i32_0 = arith.constant 0 : i32
    return %arg0, %c0_i32, %arg1 : i32, i32, i32
  }
  func.func @transform_1(%arg0: i32, %arg1: i32) -> (i32, i32) {
    %c0_i32 = arith.constant 0 : i32
    %c0_i32_0 = arith.constant 0 : i32
    %c0_i32_1 = arith.constant 0 : i32
    return %c0_i32, %c0_i32_0 : i32, i32
  }
  func.func @transform_2(%arg0: i32, %arg1: i32) -> (i32, i32) {
    %c0_i32 = arith.constant 0 : i32
    %c0_i32_0 = arith.constant 0 : i32
    %c0_i32_1 = arith.constant 0 : i32
    return %c0_i32, %c0_i32_0 : i32, i32
  }
  func.func @transform_3(%arg0: i32, %arg1: i32) -> (i32, i32, i32) {
    %c0_i32 = arith.constant 0 : i32
    %c0_i32_0 = arith.constant 0 : i32
    return %arg0, %c0_i32, %arg1 : i32, i32, i32
  }
}

</mosaic_0001>

<llo_original>
// kernel: tpu_custom_call.1
$region0: #{tpu_custom_call.1}
  #allocation0 [shape = 'u32[]', space=smem, size = 0x4, offset = 0x4, fixed_abs, tag = 'smem constant byte address 0x4 - core index']
  #allocation1 [shape = 'u32[144,128]{1,0:T(1,128)}', space=vmem, size = 0x12000, scoped, tag = 'internal scratch']
  %s0 = inlined_call_operand.vmem [shape: f32[2,64,16], index: 0, kind: input, shape index: {}]
  %s1 = inlined_call_operand.vmem [shape: f32[32,64], index: 1, kind: input, shape index: {}]
  %s2 = inlined_call_operand.vmem [shape: f32[32,1], index: 2, kind: input, shape index: {}]
  %s3 = inlined_call_operand.vmem [shape: f32[2,32,16], index: 3, kind: output, shape index: {}]
  %s4 = sld [smem:[#allocation0]]
  $region45: #{tpu_custom_call.1} parent=0
    _
  %s6 = ssub.s32 1, %s4
  %s7 = scalar_select 0, %s6, %s4
  loop: start=0, step=1, limit=4
  $region2: #{tpu_custom_call.1} parent=0 // loop_pre_header
    _
  $region3: #{tpu_custom_call.1} parent=0 // loop_header
    %s9 = sphi 0, %s13
    %p10 = scmp.ge.s32.totalorder %s9, 4
    %s16 = sphi 0, %s28
    %s17 = sphi 0, %s24
    %s18 = sphi 0, %s16
    %s19 = sphi 0, %s17
    %s20 = sphi 0, %s18
    %s21 = sphi 0, %s19
    %s33 = sphi 0, %s35
    %s36 = sphi 0, %s33
    %s37 = sphi 0, %s36
    %s53 = sphi 0, %s37
    %s57 = sphi 0, %s57
    %s59 = sphi 0, %s57
    %s60 = sphi 0, %s59
    %s74 = sphi 0, %s60
    %s78 = sphi 0, %s78
    %s80 = sphi 0, %s78
    %s81 = sphi 0, %s80
    %s95 = sphi 0, %s81
    %s103 = sphi 0, %s105
    %s106 = sphi 0, %s103
    %s107 = sphi 0, %s106
    %s123 = sphi 0, %s107
  $region4: #{tpu_custom_call.1} parent=0 // loop_header_branch
    %12 = sbr.rel (%p10) target = $region8
  $region5: #{tpu_custom_call.1} parent=0 // loop_body
    %s14 = ssub.s32 %s9, 1
    %s15 = ssub.s32 %s9, 2
    %s22 = sadd.s32 1, %s17
    %p23 = scmp.ge.s32.totalorder %s22, 1
    %s24 = scalar_select %p23, 0, %s22
    %s25 = sadd.s32 1, %s16
    %s26 = scalar_select %p23, %s25, %s16
    %p27 = scmp.ge.s32.totalorder %s26, 2
    %s28 = scalar_select %p27, 0, %s26
    %s29 = ssub.s32 %s16, %s28
    %s30 = ssub.s32 %s17, %s24
    %s31 = sor.u32 %s29, %s30
    %p32 = scmp.eq.s32.totalorder %s31, 0
    %s34 = sadd.s32 %s33, 1
    %s35 = scalar_select %p32, %s33, %s34
    %p38 = pneg %p32
    %p39 = scmp.eq.s32.totalorder %s9, 1
    %p40 = por %p38, %p39
    %p41 = scmp.ne.s32.totalorder %s33, %s36
    %p42 = scmp.eq.s32.totalorder %s9, 0
    %p43 = por %p41, %p42
    %p44 = scmp.ne.s32.totalorder %s33, %s36
    %p45 = scmp.eq.s32.totalorder %s14, 1
    %p46 = por %p44, %p45
    %p47 = scmp.ne.s32.totalorder %s36, %s37
    %p48 = scmp.eq.s32.totalorder %s14, 0
    %p49 = por %p47, %p48
    %p50 = scmp.ne.s32.totalorder %s36, %s37
    %p51 = scmp.eq.s32.totalorder %s15, 1
    %p52 = por %p50, %p51
    %p54 = scmp.ne.s32.totalorder %s37, %s53
    %p55 = scmp.eq.s32.totalorder %s15, 0
    %p56 = por %p54, %p55
    %s58 = sadd.s32 %s57, 1
    %p61 = scmp.eq.s32.totalorder %s9, 1
    %p62 = scmp.ne.s32.totalorder %s57, %s59
    %p63 = scmp.eq.s32.totalorder %s9, 0
    %p64 = por %p62, %p63
    %p65 = scmp.ne.s32.totalorder %s57, %s59
    %p66 = scmp.eq.s32.totalorder %s14, 1
    %p67 = por %p65, %p66
    %p68 = scmp.ne.s32.totalorder %s59, %s60
    %p69 = scmp.eq.s32.totalorder %s14, 0
    %p70 = por %p68, %p69
    %p71 = scmp.ne.s32.totalorder %s59, %s60
    %p72 = scmp.eq.s32.totalorder %s15, 1
    %p73 = por %p71, %p72
    %p75 = scmp.ne.s32.totalorder %s60, %s74
    %p76 = scmp.eq.s32.totalorder %s15, 0
    %p77 = por %p75, %p76
    %s79 = sadd.s32 %s78, 1
    %p82 = scmp.eq.s32.totalorder %s9, 1
    %p83 = scmp.ne.s32.totalorder %s78, %s80
    %p84 = scmp.eq.s32.totalorder %s9, 0
    %p85 = por %p83, %p84
    %p86 = scmp.ne.s32.totalorder %s78, %s80
    %p87 = scmp.eq.s32.totalorder %s14, 1
    %p88 = por %p86, %p87
    %p89 = scmp.ne.s32.totalorder %s80, %s81
    %p90 = scmp.eq.s32.totalorder %s14, 0
    %p91 = por %p89, %p90
    %p92 = scmp.ne.s32.totalorder %s80, %s81
    %p93 = scmp.eq.s32.totalorder %s15, 1
    %p94 = por %p92, %p93
    %p96 = scmp.ne.s32.totalorder %s81, %s95
    %p97 = scmp.eq.s32.totalorder %s15, 0
    %p98 = por %p96, %p97
    %s99 = ssub.s32 %s16, %s28
    %s100 = ssub.s32 %s17, %s24
    %s101 = sor.u32 %s99, %s100
    %p102 = scmp.eq.s32.totalorder %s101, 0
    %s104 = sadd.s32 %s103, 1
    %s105 = scalar_select %p102, %s103, %s104
    %p108 = pneg %p102
    %p109 = scmp.eq.s32.totalorder %s9, 1
    %p110 = por %p108, %p109
    %p111 = scmp.ne.s32.totalorder %s103, %s106
    %p112 = scmp.eq.s32.totalorder %s9, 0
    %p113 = por %p111, %p112
    %p114 = scmp.ne.s32.totalorder %s103, %s106
    %p115 = scmp.eq.s32.totalorder %s14, 1
    %p116 = por %p114, %p115
    %p117 = scmp.ne.s32.totalorder %s106, %s107
    %p118 = scmp.eq.s32.totalorder %s14, 0
    %p119 = por %p117, %p118
    %p120 = scmp.ne.s32.totalorder %s106, %s107
    %p121 = scmp.eq.s32.totalorder %s15, 1
    %p122 = por %p120, %p121
    %p124 = scmp.ne.s32.totalorder %s107, %s123
    %p125 = scmp.eq.s32.totalorder %s15, 0
    %p126 = por %p124, %p125
    %p127 = scmp.le.s32.totalorder 1, %s9
    %p128 = scmp.lt.s32.totalorder %s9, 3
    %p129 = pnand %p127, %p128
    %p130 = pneg %p129
    // Predicated region
    $region9: #{tpu_custom_call.1} parent=5 // pred_check
      _
    $region10: #{tpu_custom_call.1} parent=5 // pred_check_branch
      %132 = sbr.rel (%p129) target = $region12
    $region11: #{tpu_custom_call.1} parent=5 // pred_region
      %s133 = ssub.s32 %s9, 1
      // Predicated region
      $region13: #{tpu_custom_call.1} parent=11 // pred_check
        %p134 = pneg %p70
      $region14: #{tpu_custom_call.1} parent=11 // pred_check_branch
        %136 = sbr.rel (%p134) target = $region16
      $region15: #{tpu_custom_call.1} parent=11 // pred_region
        _
      $region16: #{tpu_custom_call.1} parent=11 // pred_fallthru
        _
      // Predicated region
      $region17: #{tpu_custom_call.1} parent=11 // pred_check
        %p137 = pneg %p91
      $region18: #{tpu_custom_call.1} parent=11 // pred_check_branch
        %139 = sbr.rel (%p137) target = $region20
      $region19: #{tpu_custom_call.1} parent=11 // pred_region
        _
      $region20: #{tpu_custom_call.1} parent=11 // pred_fallthru
        _
    $region12: #{tpu_custom_call.1} parent=5 // pred_fallthru
      _
    %p140 = scmp.lt.s32.totalorder %s9, 2
    // Predicated region
    $region21: #{tpu_custom_call.1} parent=5 // pred_check
      %p141 = pneg %p140
    $region22: #{tpu_custom_call.1} parent=5 // pred_check_branch
      %143 = sbr.rel (%p141) target = $region24
    $region23: #{tpu_custom_call.1} parent=5 // pred_region
      // Predicated region
      $region25: #{tpu_custom_call.1} parent=23 // pred_check
        %p144 = pneg %p43
      $region26: #{tpu_custom_call.1} parent=23 // pred_check_branch
        %146 = sbr.rel (%p144) target = $region28
      $region27: #{tpu_custom_call.1} parent=23 // pred_region
        %p147 = scmp.lt.s32.totalorder %s16, 1
        %s148 = scalar_select %p147, %s16, 1
        %p149 = scmp.lt.s32.totalorder %s17, 0
        %s150 = scalar_select %p149, %s17, 0
        %s151 = smul.addr %s148, 8
        %s152 = sadd.s32 %s150, %s151
        %s153 = smul.addr %s152, 8
        %s154 = scalar_lea.vmem %s0, %s153
      $region28: #{tpu_custom_call.1} parent=23 // pred_fallthru
        _
    $region24: #{tpu_custom_call.1} parent=5 // pred_fallthru
      _
    %p155 = scmp.le.s32.totalorder 1, %s9
    %p156 = scmp.lt.s32.totalorder %s9, 3
    %p157 = pnand %p155, %p156
    %p158 = pneg %p157
    // Predicated region
    $region29: #{tpu_custom_call.1} parent=5 // pred_check
      _
    $region30: #{tpu_custom_call.1} parent=5 // pred_check_branch
      %160 = sbr.rel (%p157) target = $region32
    $region31: #{tpu_custom_call.1} parent=5 // pred_region
      %s161 = ssub.s32 %s9, 1
      %p162 = scmp.lt.s32.totalorder %s18, 1
      %s163 = scalar_select %p162, %s18, 1
      %p164 = scmp.lt.s32.totalorder %s19, 0
      %s165 = scalar_select %p164, %s19, 0
      %s166 = smul.addr %s163, 8
      %s167 = sadd.s32 %s165, %s166
      %s168 = smul.addr %s167, 8
      %s169 = scalar_lea.vmem %s0, %s168
      %p170 = pneg %p49
      %p171 = pneg %p46
      %p172 = pneg %p70
      %p173 = pneg %p67
      %p174 = pneg %p91
      %p175 = pneg %p88
      %p176 = pneg %p119
      %p177 = pneg %p116
      %p178 = scmp.lt.s32.totalorder %s18, 1
      %s179 = scalar_select %p178, %s18, 1
      %p180 = scmp.lt.s32.totalorder %s19, 0
      %s181 = scalar_select %p180, %s19, 0
      %s182 = smul.addr %s179, 4
      %s183 = sadd.s32 %s181, %s182
      %s184 = smul.addr %s183, 8
      %s185 = scalar_lea.vmem %s3, %s184
      %p186 = scmp.lt.s32.totalorder %s18, 1
      %s187 = scalar_select %p186, %s18, 1
      %p188 = scmp.lt.s32.totalorder %s19, 0
      %s189 = scalar_select %p188, %s19, 0
      %s190 = smul.addr %s187, 8
      %s191 = sadd.s32 %s189, %s190
      %s192 = smul.addr %s191, 8
      %s193 = scalar_lea.vmem %s0, %s192
      %p194 = scmp.lt.s32.totalorder %s18, 1
      %s195 = scalar_select %p194, %s18, 1
      %p196 = scmp.lt.s32.totalorder %s19, 0
      %s197 = scalar_select %p196, %s19, 0
      %s198 = smul.addr %s195, 4
      %s199 = sadd.s32 %s197, %s198
      %s200 = smul.addr %s199, 8
      %s201 = scalar_lea.vmem %s3, %s200
      %v202 = vld [vmem:[%s1] sm:$0xff]
      %v203 = vld [vmem:[%s1 + $0x8] sm:$0xff]
      %v204 = vld [vmem:[%s1 + $0x10] sm:$0xff]
      %v205 = vld [vmem:[%s1 + $0x18] sm:$0xff]
      %v206 = vld [vmem:[%s193] sm:$0xff]
      %v207 = vld [vmem:[%s193 + $0x8] sm:$0xff]
      %v208 = vld [vmem:[%s193 + $0x10] sm:$0xff]
      %v209 = vld [vmem:[%s193 + $0x18] sm:$0xff]
      %v210 = vld [vmem:[%s193 + $0x20] sm:$0xff]
      %v211 = vld [vmem:[%s193 + $0x28] sm:$0xff]
      %v212 = vld [vmem:[%s193 + $0x30] sm:$0xff]
      %v213 = vld [vmem:[%s193 + $0x38] sm:$0xff]
      %v214 = vld [vmem:[%s2] sm:$0xff]
      %v215 = vld [vmem:[%s2 + $0x8] sm:$0xff]
      %v216 = vld [vmem:[%s2 + $0x10] sm:$0xff]
      %v217 = vld [vmem:[%s2 + $0x18] sm:$0xff]
      %219 = vset.pattern.permute.xlu0 0
      %220 = vperm.xlu0 %219, %v214
      %v221 = vpop.permute.xlu0 %220
      %224 = vset.pattern.permute.xlu0 0
      %225 = vperm.xlu0 %224, %v215
      %v226 = vpop.permute.xlu0 %225
      %229 = vset.pattern.permute.xlu0 0
      %230 = vperm.xlu0 %229, %v216
      %v231 = vpop.permute.xlu0 %230
      %234 = vset.pattern.permute.xlu0 0
      %235 = vperm.xlu0 %234, %v217
      %v236 = vpop.permute.xlu0 %235
      %vm238 = vcmask 523264
      %v240 = vsel %vm238, %v202, 0
      %v243 = vsel %vm238, %v203, 0
      %v246 = vsel %vm238, %v204, 0
      %v249 = vsel %vm238, %v205, 0
      %251 = vmatprep.subr.mxu0 0.0
      %252 = vmatpush1.msra.mxu0 %v206
      %253 = vmatprep.subr.mxu0 0.0
      %254 = vmatpush1.msra.mxu0 %v207
      %255 = vmatprep.subr.mxu0 0.0
      %256 = vmatpush1.msra.mxu0 %v208
      %257 = vmatprep.subr.mxu0 0.0
      %258 = vmatpush1.msra.mxu0 %v209
      %259 = vmatprep.subr.mxu0 0.0
      %260 = vmatpush1.msra.mxu0 %v210
      %261 = vmatprep.subr.mxu0 0.0
      %262 = vmatpush1.msra.mxu0 %v211
      %263 = vmatprep.subr.mxu0 0.0
      %264 = vmatpush1.msra.mxu0 %v212
      %265 = vmatprep.subr.mxu0 0.0
      %266 = vmatpush1.msra.mxu0 %v213
      %267 = vmatprep.subr.mxu0 0.0
      %268 = vmatpush1.msra.mxu0 0.0
      %269 = vmatprep.subr.mxu0 0.0
      %270 = vmatpush1.msra.mxu0 0.0
      %271 = vmatprep.subr.mxu0 0.0
      %272 = vmatpush1.msra.mxu0 0.0
      %273 = vmatprep.subr.mxu0 0.0
      %274 = vmatpush1.msra.mxu0 0.0
      %275 = vmatprep.subr.mxu0 0.0
      %276 = vmatpush1.msra.mxu0 0.0
      %277 = vmatprep.subr.mxu0 0.0
      %278 = vmatpush1.msra.mxu0 0.0
      %279 = vmatprep.subr.mxu0 0.0
      %280 = vmatpush1.msra.mxu0 0.0
      %281 = vmatprep.subr.mxu0 0.0
      %282 = vmatpush1.msra.mxu0 0.0
      %283 = vmatprep.subr.mxu0 0.0
      %284 = vmatpush1.msra.mxu0 0.0
      %285 = vmatprep.subr.mxu0 0.0
      %286 = vmatpush1.msra.mxu0 0.0
      %287 = vmatprep.subr.mxu0 0.0
      %288 = vmatpush1.msra.mxu0 0.0
      %289 = vmatprep.subr.mxu0 0.0
      %290 = vmatpush1.msra.mxu0 0.0
      %291 = vmatprep.subr.mxu0 0.0
      %292 = vmatpush1.msra.mxu0 0.0
      %293 = vmatprep.subr.mxu0 0.0
      %294 = vmatpush1.msra.mxu0 0.0
      %295 = vmatprep.subr.mxu0 0.0
      %296 = vmatpush1.msra.mxu0 0.0
      %297 = vmatprep.subr.mxu0 0.0
      %298 = vmatpush1.msra.mxu0 0.0
      %299 = vmatprep.subr.mxu0 0.0
      %300 = vmatpush1.msra.mxu0 0.0
      %301 = vmatprep.subr.mxu0 0.0
      %302 = vmatpush1.msra.mxu0 0.0
      %303 = vmatprep.subr.mxu0 0.0
      %304 = vmatpush1.msra.mxu0 0.0
      %305 = vmatprep.subr.mxu0 0.0
      %306 = vmatpush1.msra.mxu0 0.0
      %307 = vmatprep.subr.mxu0 0.0
      %308 = vmatpush1.msra.mxu0 0.0
      %309 = vmatprep.subr.mxu0 0.0
      %310 = vmatpush1.msra.mxu0 0.0
      %311 = vmatprep.subr.mxu0 0.0
      %312 = vmatpush1.msra.mxu0 0.0
      %313 = vmatprep.subr.mxu0 0.0
      %314 = vmatpush1.msra.mxu0 0.0
      %315 = vmatprep.mubr.f32.mxu0 0.0
      %316 = vmatmul.mubr.f32.gmra.mrb[0].mxu0 %v240
      %v317 = vpop.f32.mrb[0].mxu0
      %v318 = vadd.f32 %v221, %v317
      %v319 = vpop.f32.mrb[0].mxu0
      %320 = vmatprep.mubr.f32.mxu0 0.0
      %321 = vmatmul.mubr.f32.gmra.mrb[0].mxu0 %v243
      %v322 = vpop.f32.mrb[0].mxu0
      %v323 = vadd.f32 %v226, %v322
      %v324 = vpop.f32.mrb[0].mxu0
      %325 = vmatprep.mubr.f32.mxu0 0.0
      %326 = vmatmul.mubr.f32.gmra.mrb[0].mxu0 %v246
      %v327 = vpop.f32.mrb[0].mxu0
      %v328 = vadd.f32 %v231, %v327
      %v329 = vpop.f32.mrb[0].mxu0
      %330 = vmatprep.mubr.f32.mxu0 0.0
      %331 = vmatmul.mubr.f32.gmra.mrb[0].mxu0 %v249
      %v332 = vpop.f32.mrb[0].mxu0
      %v333 = vadd.f32 %v236, %v332
      %v334 = vpop.f32.mrb[0].mxu0
      %335 = vdwg.mxu0
      %vm336 = vcmask 130048
      %337 = vst.msk [vmem:[%s201] sm:$0xff] %vm336, %v318
      %338 = vst.msk [vmem:[%s201 + $0x8] sm:$0xff] %vm336, %v323
      %339 = vst.msk [vmem:[%s201 + $0x10] sm:$0xff] %vm336, %v328
      %340 = vst.msk [vmem:[%s201 + $0x18] sm:$0xff] %vm336, %v333
      %p341 = scmp.lt.s32.totalorder %s18, 1
      %s342 = scalar_select %p341, %s18, 1
      %p343 = scmp.lt.s32.totalorder %s19, 0
      %s344 = scalar_select %p343, %s19, 0
      %s345 = smul.addr %s342, 4
      %s346 = sadd.s32 %s344, %s345
      %s347 = smul.addr %s346, 8
      %s348 = scalar_lea.vmem %s3, %s347
      // Predicated region
      $region33: #{tpu_custom_call.1} parent=31 // pred_check
        %p349 = pneg %p116
      $region34: #{tpu_custom_call.1} parent=31 // pred_check_branch
        %351 = sbr.rel (%p349) target = $region36
      $region35: #{tpu_custom_call.1} parent=31 // pred_region
        _
      $region36: #{tpu_custom_call.1} parent=31 // pred_fallthru
        _
    $region32: #{tpu_custom_call.1} parent=5 // pred_fallthru
      _
    %p352 = scmp.le.s32.totalorder 2, %s9
    // Predicated region
    $region37: #{tpu_custom_call.1} parent=5 // pred_check
      %p353 = pneg %p352
    $region38: #{tpu_custom_call.1} parent=5 // pred_check_branch
      %355 = sbr.rel (%p353) target = $region40
    $region39: #{tpu_custom_call.1} parent=5 // pred_region
      %s356 = ssub.s32 %s9, 2
      // Predicated region
      $region41: #{tpu_custom_call.1} parent=39 // pred_check
        %p357 = pneg %p122
      $region42: #{tpu_custom_call.1} parent=39 // pred_check_branch
        %359 = sbr.rel (%p357) target = $region44
      $region43: #{tpu_custom_call.1} parent=39 // pred_region
        %p360 = scmp.lt.s32.totalorder %s20, 1
        %s361 = scalar_select %p360, %s20, 1
        %p362 = scmp.lt.s32.totalorder %s21, 0
        %s363 = scalar_select %p362, %s21, 0
        %s364 = smul.addr %s361, 4
        %s365 = sadd.s32 %s363, %s364
        %s366 = smul.addr %s365, 8
        %s367 = scalar_lea.vmem %s3, %s366
      $region44: #{tpu_custom_call.1} parent=39 // pred_fallthru
        _
    $region40: #{tpu_custom_call.1} parent=5 // pred_fallthru
      _
  $region6: #{tpu_custom_call.1} parent=0 // loop_footer
    %s13 = sadd.s32 1, %s9
  $region7: #{tpu_custom_call.1} parent=0 // loop_footer_branch
    %8 = sbr.rel target = $region3
  $region8: #{tpu_custom_call.1} parent=0 // loop_exit
    _

</llo_original>
